<compile_context>
chip_gen: v7x
topology: tpu7x:2x2x1
jax: 0.10.0
libtpu: 0.0.40
codegen_flags: <defaults>
</compile_context>

<pallas_src>
import functools
import math
import numpy as np
import jax
import jax.numpy as jnp
from jax.experimental import pallas as pl
from jax.experimental.pallas import tpu as pltpu


# ------------------------------ tiling helpers ------------------------------

_SUBLANE_BF16 = 16        # bf16 tiles are (16, 128)
_TM_CAP = 8192            # row-tile cap (early layers have tiny K)


def _round_up(x, m):
    return ((x + m - 1) // m) * m


def _vmem_limit_bytes():
    """Generation-aware scoped-VMEM limit."""
    phys = 64 * 1024 * 1024
    try:
        phys = int(pltpu.get_tpu_info().vmem_capacity_bytes)
    except Exception:
        pass
    if phys >= 100 * 1024 * 1024:        # v5e / v6e: 128 MiB physical
        return 96 * 1024 * 1024
    return phys // 2                      # v7x: 64 MiB physical -> 32 MiB


_VMEM_LIMIT_BYTES = _vmem_limit_bytes()


def _plan_rows(m, streamed_bytes_per_row, resident_bytes):
    """Pick (row_tile, padded_rows) for the N*Ho*Wo axis.

    Accounts for 2x double-buffering of the streamed tiles and of the
    resident (constant-index) weight matrices, bounds dead-row padding, and
    keeps >= 2 grid steps for v7x's two TensorCores when rows allow it.
    """
    budget = _VMEM_LIMIT_BYTES - 2 * resident_bytes - (4 << 20)  # epilogue slack
    budget = max(budget, 4 << 20)
    tm = budget // (2 * max(streamed_bytes_per_row, 1))
    tm = min(_TM_CAP, max(256, (tm // 256) * 256))
    if m <= 256:
        mp = _round_up(m, _SUBLANE_BF16)          # single block, bf16 sublanes
        return mp, mp
    # bound dead-row padding to <= max(m/8, 256)
    while tm > 256 and _round_up(m, tm) - m > max(m // 8, 256):
        tm = max(256, ((tm // 2) // 256) * 256)
    m_pad = _round_up(m, tm)
    # keep both v7x TensorCores busy on short utterances
    if m_pad // tm < 2 and m_pad >= 512:
        tm = m_pad // 2
    return tm, m_pad


# ----------------------------- Pallas kernels ------------------------------

def _conv_bn_kernel(p_ref, w_ref, s_ref, b_ref, o_ref, *, relu):
    # bf16 MXU matmul, f32 accumulate + folded-BN affine epilogue.
    acc = jnp.dot(p_ref[...], w_ref[...], preferred_element_type=jnp.float32)
    acc = acc * s_ref[...] + b_ref[...]
    if relu:
        acc = jnp.maximum(acc, 0.0)
    o_ref[...] = acc.astype(o_ref.dtype)


def _conv_bn_add_kernel(p_ref, w_ref, s_ref, b_ref, r_ref, o_ref):
    # conv2 + BN2 + identity residual + ReLU (fused BasicBlock tail).
    acc = jnp.dot(p_ref[...], w_ref[...], preferred_element_type=jnp.float32)
    acc = acc * s_ref[...] + b_ref[...] + r_ref[...].astype(jnp.float32)
    o_ref[...] = jnp.maximum(acc, 0.0).astype(o_ref.dtype)


def _conv_bn_shortcut_kernel(p_ref, w_ref, s_ref, b_ref,
                             ps_ref, ws_ref, ss_ref, bs_ref, o_ref):
    # conv2 + BN2 + (fused strided 1x1 shortcut conv + BN) + add + ReLU.
    acc = jnp.dot(p_ref[...], w_ref[...], preferred_element_type=jnp.float32)
    acc = acc * s_ref[...] + b_ref[...]
    sc = jnp.dot(ps_ref[...], ws_ref[...], preferred_element_type=jnp.float32)
    sc = sc * ss_ref[...] + bs_ref[...]
    o_ref[...] = jnp.maximum(acc + sc, 0.0).astype(o_ref.dtype)


def _pool_embed_kernel(x_ref, w_ref, b_ref, o_ref, sum_ref, sq_ref,
                       *, t_total, n, f, e):
    # Stats pooling over time, tiled/accumulated over the grid's T axis (f32
    # accumulators), followed by bf16 MXU embedding matmuls on the last step.
    t = pl.program_id(0)

    @pl.when(t == 0)
    def _():
        sum_ref[...] = jnp.zeros_like(sum_ref)
        sq_ref[...] = jnp.zeros_like(sq_ref)

    x = x_ref[...].astype(jnp.float32)              # (F*N, Tt, C)
    sum_ref[...] += jnp.sum(x, axis=1)              # sublane reduction, f32
    sq_ref[...] += jnp.sum(x * x, axis=1)

    @pl.when(t == pl.num_programs(0) - 1)
    def _():
        inv_t = 1.0 / t_total
        mean = sum_ref[...] * inv_t                 # (F*N, C)
        var = jnp.maximum(sq_ref[...] * inv_t - mean * mean, 0.0)  # clamp >= 0
        std = jnp.sqrt(var + 1e-10)
        stats = jnp.concatenate([mean, std], axis=-1).astype(jnp.bfloat16)
        acc = jnp.zeros((n, e), jnp.float32) + b_ref[...]
        for fi in range(f):                         # small static unroll over F
            acc = acc + jnp.dot(stats[fi * n:(fi + 1) * n, :], w_ref[fi],
                                preferred_element_type=jnp.float32)
        o_ref[...] = acc


# ------------------------------ glue wrappers -------------------------------

def _im2col(x_nhwc, kh, kw, stride, pad):
    """Tap-major / channel-minor im2col patch matrix in bf16.

    TODO(synk): host-side materialisation; see halo-DMA TODO at top of file.
    """
    N, H, W, C = x_nhwc.shape
    Ho = (H + 2 * pad - kh) // stride + 1
    Wo = (W + 2 * pad - kw) // stride + 1
    if pad:
        x_nhwc = jnp.pad(x_nhwc, ((0, 0), (pad, pad), (pad, pad), (0, 0)))
    cols = []
    for dh in range(kh):
        for dw in range(kw):
            cols.append(
                x_nhwc[:, dh:dh + stride * (Ho - 1) + 1:stride,
                       dw:dw + stride * (Wo - 1) + 1:stride, :]
                .reshape(N * Ho * Wo, C))
    patches = cols[0] if len(cols) == 1 else jnp.concatenate(cols, axis=1)
    return patches.astype(jnp.bfloat16), (N, Ho, Wo)


def conv_bn(x_nhwc, wmat, scale, bias, ksize, stride, pad, relu=True,
            residual=None, shortcut=None):
    """Fused conv (im2col matmul) + folded BN [+ residual / fused 1x1 shortcut]
    [+ ReLU], row-tiled over N*Ho*Wo with a parallel 1-D grid.

    wmat: (kh*kw*cin, cout) bf16; scale/bias: (1, cout) f32 (pre-laid-out).
    residual: NHWC tensor added before the final ReLU (identity shortcut).
    shortcut: (x_in_nhwc, sc_wmat, sc_scale, sc_bias, sc_stride) for a fused
              strided 1x1-conv+BN shortcut branch (ReLU applied at the end).
    """
    kh, kw = ksize
    cin = x_nhwc.shape[-1]
    k = kh * kw * cin
    cout = wmat.shape[1]
    assert wmat.shape[0] == k, (wmat.shape, k)

    patches, (N, Ho, Wo) = _im2col(x_nhwc, kh, kw, stride, pad)
    m = N * Ho * Wo

    # streamed bytes per output row (bf16 in/out) and resident weight bytes.
    streamed = (k + cout) * 2
    resident = wmat.size * 2 + 2 * cout * 4
    if shortcut is not None:
        x_in, w_sc_mat, s_sc, b_sc, sc_stride = shortcut
        p_sc, dims_sc = _im2col(x_in, 1, 1, sc_stride, 0)
        assert dims_sc == (N, Ho, Wo), (dims_sc, (N, Ho, Wo))
        k_sc = w_sc_mat.shape[0]
        streamed += k_sc * 2
        resident += w_sc_mat.size * 2 + 2 * cout * 4
    elif residual is not None:
        r_mat = residual.reshape(m, cout)
        streamed += cout * 2

    tm, m_pad = _plan_rows(m, streamed, resident)

    def _pad_rows(a):
        if m_pad == a.shape[0]:
            return a
        return jnp.pad(a, ((0, m_pad - a.shape[0]), (0, 0)))

    def row_spec(width):
        return pl.BlockSpec((tm, width), lambda i: (i, 0))

    def const_spec(shape):
        return pl.BlockSpec(shape, lambda i: tuple(0 for _ in shape))

    if shortcut is not None:
        kernel = _conv_bn_shortcut_kernel
        args = [_pad_rows(patches), wmat, scale, bias,
                _pad_rows(p_sc), w_sc_mat, s_sc, b_sc]
        in_specs = [row_spec(k), const_spec((k, cout)), const_spec((1, cout)),
                    const_spec((1, cout)), row_spec(k_sc),
                    const_spec((k_sc, cout)), const_spec((1, cout)),
                    const_spec((1, cout))]
    elif residual is not None:
        kernel = _conv_bn_add_kernel
        args = [_pad_rows(patches), wmat, scale, bias, _pad_rows(r_mat)]
        in_specs = [row_spec(k), const_spec((k, cout)), const_spec((1, cout)),
                    const_spec((1, cout)), row_spec(cout)]
    else:
        kernel = functools.partial(_conv_bn_kernel, relu=relu)
        args = [_pad_rows(patches), wmat, scale, bias]
        in_specs = [row_spec(k), const_spec((k, cout)), const_spec((1, cout)),
                    const_spec((1, cout))]

    out = pl.pallas_call(
        kernel,
        out_shape=jax.ShapeDtypeStruct((m_pad, cout), jnp.bfloat16),
        grid=(m_pad // tm,),
        in_specs=in_specs,
        out_specs=row_spec(cout),
        compiler_params=pltpu.CompilerParams(
            dimension_semantics=("parallel",),
            vmem_limit_bytes=_VMEM_LIMIT_BYTES),
    )(*args)
    # INVARIANT: rows [m, m_pad) contain bias/ReLU garbage from padded patch
    # rows and MUST be discarded here; never feed the padded buffer onward.
    return out[:m].reshape(N, Ho, Wo, cout)


def pool_embed(out_nhwc, pool_w, pool_b):
    """Stats pooling (mean/std over time) + Linear embedding, T-tiled.

    pool_w: (F, 2*C, E) bf16 (mean rows then std rows per frequency bin, in
            the torch flatten order); pool_b: (1, E) f32.
    """
    N, F_, T_, C = out_nhwc.shape
    E = pool_w.shape[-1]
    # (F, N, T, C) -> (F*N, T, C): fixed-f rows contiguous, so the kernel needs
    # no transpose; the torch flatten order (C-major, F-minor) is folded into
    # the host-side (one-time) permutation of the embedding weight.
    x = (jnp.transpose(out_nhwc, (1, 0, 2, 3))
         .reshape(F_ * N, T_, C).astype(jnp.bfloat16))
    t_tile = T_ if T_ <= 2048 else 512
    t_pad = _round_up(T_, t_tile)
    if t_pad != T_:
        x = jnp.pad(x, ((0, 0), (0, t_pad - T_), (0, 0)))  # zeros don't affect sums

    kernel = functools.partial(_pool_embed_kernel,
                               t_total=T_, n=N, f=F_, e=E)
    return pl.pallas_call(
        kernel,
        out_shape=jax.ShapeDtypeStruct((N, E), jnp.float32),
        grid=(t_pad // t_tile,),
        in_specs=[
            pl.BlockSpec((F_ * N, t_tile, C), lambda t: (0, t, 0)),
            pl.BlockSpec((F_, 2 * C, E), lambda t: (0, 0, 0)),
            pl.BlockSpec((1, E), lambda t: (0, 0)),
        ],
        out_specs=pl.BlockSpec((N, E), lambda t: (0, 0)),
        scratch_shapes=[pltpu.VMEM((F_ * N, C), jnp.float32),
                        pltpu.VMEM((F_ * N, C), jnp.float32)],
        compiler_params=pltpu.CompilerParams(
            dimension_semantics=("arbitrary",),
            vmem_limit_bytes=_VMEM_LIMIT_BYTES),
    )(x, pool_w, pool_b)


# ----------------------------- parameter setup ------------------------------

def _fold_bn(gamma, beta, mean, var, eps=1e-5):
    scale = gamma / jnp.sqrt(var + eps)
    return scale, beta - mean * scale


def _init_conv(key, cout, cin, kh, kw):
    fan = cin * kh * kw
    return jax.random.normal(key, (cout, cin, kh, kw), jnp.float32) / math.sqrt(fan)


def _init_bn(key, c):
    k1, k2, k3, k4 = jax.random.split(key, 4)
    gamma = 1.0 + 0.1 * jax.random.normal(k1, (c,), jnp.float32)
    beta = 0.1 * jax.random.normal(k2, (c,), jnp.float32)
    mean = 0.1 * jax.random.normal(k3, (c,), jnp.float32)
    var = 1.0 + 0.5 * jax.random.uniform(k4, (c,), jnp.float32)
    return _fold_bn(gamma, beta, mean, var)


def build_params(key, m_channels, feat_dim, embed_dim, num_blocks):
    params = {}
    keys = iter(jax.random.split(key, 256))
    params['conv1_w'] = _init_conv(next(keys), m_channels, 1, 3, 3)
    params['bn1'] = _init_bn(next(keys), m_channels)
    in_planes = m_channels
    layers = []
    plane_mults = [1, 2, 4, 8]
    strides_first = [1, 2, 2, 2]
    for li in range(4):
        planes = m_channels * plane_mults[li]
        strides = [strides_first[li]] + [1] * (num_blocks[li] - 1)
        blocks = []
        for s in strides:
            blk = {
                'stride': s,
                'w1': _init_conv(next(keys), planes, in_planes, 3, 3),
                'bn1': _init_bn(next(keys), planes),
                'w2': _init_conv(next(keys), planes, planes, 3, 3),
                'bn2': _init_bn(next(keys), planes),
            }
            if s != 1 or in_planes != planes:       # BasicBlock.expansion == 1
                blk['short_w'] = _init_conv(next(keys), planes, in_planes, 1, 1)
                blk['short_bn'] = _init_bn(next(keys), planes)
            else:
                blk['short_w'] = None
            blocks.append(blk)
            in_planes = planes
        layers.append(blocks)
    params['layers'] = layers
    cfd = feat_dim
    for _ in range(3):
        cfd = int((cfd - 1) / 2) + 1
    emb_in = m_channels * 8 * 2 * cfd
    params['emb_w'] = jax.random.normal(next(keys), (emb_in, embed_dim),
                                        jnp.float32) / math.sqrt(emb_in)
    params['emb_b'] = 0.1 * jax.random.normal(next(keys), (embed_dim,), jnp.float32)
    params['meta'] = dict(m_channels=m_channels, feat_dim=feat_dim,
                          embed_dim=embed_dim, pool_freq_dim=cfd)
    return params


def prepare_params(params):
    """One-time host-side relayout of every weight into the kernel layouts."""
    def conv_mat(w):
        o, i, kh, kw = w.shape
        return (jnp.transpose(w, (2, 3, 1, 0)).reshape(kh * kw * i, o)
                .astype(jnp.bfloat16))

    def bn_rows(bn):
        s, b = bn
        return (s.reshape(1, -1).astype(jnp.float32),
                b.reshape(1, -1).astype(jnp.float32))

    meta = params['meta']
    pp = {'meta': meta}
    s1, b1 = bn_rows(params['bn1'])
    pp['conv1'] = dict(wmat=conv_mat(params['conv1_w']), scale=s1, bias=b1)

    layers = []
    for blocks in params['layers']:
        pblocks = []
        for blk in blocks:
            bs1, bb1 = bn_rows(blk['bn1'])
            bs2, bb2 = bn_rows(blk['bn2'])
            pblk = dict(stride=blk['stride'],
                        w1=conv_mat(blk['w1']), s1=bs1, b1=bb1,
                        w2=conv_mat(blk['w2']), s2=bs2, b2=bb2)
            if blk['short_w'] is None:
                pblk['short'] = None
            else:
                ss, sb = bn_rows(blk['short_bn'])
                pblk['short'] = (conv_mat(blk['short_w']), ss, sb)
            pblocks.append(pblk)
        layers.append(pblocks)
    pp['layers'] = layers

    C = meta['m_channels'] * 8
    F_ = meta['pool_freq_dim']
    E = meta['embed_dim']
    emb_w = params['emb_w']                                   # (2*C*F, E)
    wm = emb_w[:C * F_].reshape(C, F_, E).transpose(1, 0, 2)  # (F, C, E) mean
    ws = emb_w[C * F_:].reshape(C, F_, E).transpose(1, 0, 2)  # (F, C, E) std
    pp['pool_w'] = jnp.concatenate([wm, ws], axis=1).astype(jnp.bfloat16)
    pp['pool_b'] = params['emb_b'].reshape(1, E).astype(jnp.float32)
    return pp


# ------------------------------- forward pass -------------------------------

def resnet_forward_pallas(pp, x_bft):
    # x: (B, feat_dim, T); torch does x.unsqueeze_(1) -> NCHW with C=1.
    # Internally NHWC (N, feat, time, C), activations stored in bf16.
    x = x_bft.astype(jnp.bfloat16)[:, :, :, None]
    c1 = pp['conv1']
    out = conv_bn(x, c1['wmat'], c1['scale'], c1['bias'], (3, 3), 1, 1,
                  relu=True)
    for blocks in pp['layers']:
        for blk in blocks:
            h = conv_bn(out, blk['w1'], blk['s1'], blk['b1'], (3, 3),
                        blk['stride'], 1, relu=True)
            if blk['short'] is None:
                # identity shortcut fused as residual add into conv2's kernel
                out = conv_bn(h, blk['w2'], blk['s2'], blk['b2'], (3, 3), 1, 1,
                              residual=out)
            else:
                # strided 1x1 shortcut conv + BN fused into conv2's kernel
                sw, ss, sb = blk['short']
                out = conv_bn(h, blk['w2'], blk['s2'], blk['b2'], (3, 3), 1, 1,
                              shortcut=(out, sw, ss, sb, blk['stride']))
    return pool_embed(out, pp['pool_w'], pp['pool_b'])


# ------------------------- pure-JAX reference (check) ------------------------

def _ref_conv_bn(x_nchw, w, scale, bias, stride, pad, relu, residual=None):
    y = jax.lax.conv_general_dilated(
        x_nchw, w, (stride, stride), [(pad, pad), (pad, pad)],
        dimension_numbers=('NCHW', 'OIHW', 'NCHW'),
        precision=jax.lax.Precision.HIGHEST)
    y = y * scale[None, :, None, None] + bias[None, :, None, None]
    if residual is not None:
        y = y + residual
    if relu:
        y = jnp.maximum(y, 0.0)
    return y


def resnet_forward_ref(params, x_bft):
    x = x_bft[:, None, :, :]
    s, b = params['bn1']
    out = _ref_conv_bn(x, params['conv1_w'], s, b, 1, 1, True)
    for blocks in params['layers']:
        for blk in blocks:
            s1, b1 = blk['bn1']
            s2, b2 = blk['bn2']
            h = _ref_conv_bn(out, blk['w1'], s1, b1, blk['stride'], 1, True)
            if blk['short_w'] is None:
                sc = out
            else:
                ss, sb = blk['short_bn']
                sc = _ref_conv_bn(out, blk['short_w'], ss, sb, blk['stride'],
                                  0, False)
            out = _ref_conv_bn(h, blk['w2'], s2, b2, 1, 1, True, residual=sc)
    mean = jnp.mean(out, axis=-1)
    meansq = jnp.mean(out * out, axis=-1)
    var = jnp.maximum(meansq - mean * mean, 0.0)   # same clamp as the kernel
    std = jnp.sqrt(var + 1e-10)
    feat = jnp.concatenate([mean.reshape(mean.shape[0], -1),
                            std.reshape(std.shape[0], -1)], axis=1)
    return jnp.dot(feat, params['emb_w'],
                   precision=jax.lax.Precision.HIGHEST) + params['emb_b']


if __name__ == "__main__":
    key = jax.random.PRNGKey(0)
    kp, kx = jax.random.split(key)
    B, feat_dim, T = 2, 16, 16
    m_channels, embed_dim = 8, 32
    num_blocks = [1, 1, 1, 1]          # small BasicBlock ResNet

    params = build_params(kp, m_channels, feat_dim, embed_dim, num_blocks)
    pp = prepare_params(params)        # one-time weight relayout (hoisted)
    x = jax.random.normal(kx, (B, feat_dim, T), jnp.float32)

    emb = jax.block_until_ready(resnet_forward_pallas(pp, x))
    ref = jax.block_until_ready(resnet_forward_ref(params, x))

    assert emb.shape == (B, embed_dim), emb.shape
    emb_np = np.asarray(emb, np.float32)
    ref_np = np.asarray(ref, np.float32)
    if not np.allclose(emb_np, ref_np, atol=6e-2, rtol=6e-2):
        raise AssertionError(
            "mismatch vs reference, max abs diff = "
            f"{np.max(np.abs(emb_np - ref_np))}")
    print("KERNEL_OK")
</pallas_src>

<mosaic_0001>
module attributes {stable_mosaic.version = 11 : i64} {
  func.func @_conv_bn_kernel(%arg0: i32, %arg1: memref<256x9xbf16, #tpu.memory_space<vmem>>, %arg2: memref<9x8xbf16, #tpu.memory_space<vmem>>, %arg3: memref<1x8xf32, #tpu.memory_space<vmem>>, %arg4: memref<1x8xf32, #tpu.memory_space<vmem>>, %arg5: memref<256x8xbf16, #tpu.memory_space<vmem>>) attributes {dimension_semantics = [#tpu.dimension_semantics<parallel>], iteration_bounds = array<i64: 2>, scalar_prefetch = 0 : i64, scratch_operands = 0 : i64, tpu.core_type = #tpu.core_type<tc>, window_params = [{transform_indices = @transform_0, window_bounds = array<i64: 256, 9>}, {pipeline_mode = #tpu.pipeline_mode<synchronous>, transform_indices = @transform_1, window_bounds = array<i64: 9, 8>}, {pipeline_mode = #tpu.pipeline_mode<synchronous>, transform_indices = @transform_2, window_bounds = array<i64: 1, 8>}, {pipeline_mode = #tpu.pipeline_mode<synchronous>, transform_indices = @transform_3, window_bounds = array<i64: 1, 8>}, {transform_indices = @transform_4, window_bounds = array<i64: 256, 8>}]} {
    %c0 = arith.constant 0 : index
    %c0_0 = arith.constant 0 : index
    %0 = vector.load %arg1[%c0, %c0_0] : memref<256x9xbf16, #tpu.memory_space<vmem>>, vector<256x9xbf16>
    %c0_1 = arith.constant 0 : index
    %c0_2 = arith.constant 0 : index
    %1 = vector.load %arg2[%c0_1, %c0_2] : memref<9x8xbf16, #tpu.memory_space<vmem>>, vector<9x8xbf16>
    %cst = arith.constant dense<0.000000e+00> : vector<256x8xf32>
    %2 = tpu.matmul %0, %1, %cst {dimension_numbers = #tpu.dot_dimension_numbers<[1], [0], [0], [1], [0, 0, 1, 1], [], []>} : vector<256x9xbf16>, vector<9x8xbf16>, vector<256x8xf32> -> vector<256x8xf32>
    %c0_3 = arith.constant 0 : index
    %c0_4 = arith.constant 0 : index
    %3 = vector.load %arg3[%c0_3, %c0_4] : memref<1x8xf32, #tpu.memory_space<vmem>>, vector<1x8xf32>
    %4 = vector.broadcast %3 : vector<1x8xf32> to vector<256x8xf32>
    %5 = arith.mulf %2, %4 : vector<256x8xf32>
    %c0_5 = arith.constant 0 : index
    %c0_6 = arith.constant 0 : index
    %6 = vector.load %arg4[%c0_5, %c0_6] : memref<1x8xf32, #tpu.memory_space<vmem>>, vector<1x8xf32>
    %7 = vector.broadcast %6 : vector<1x8xf32> to vector<256x8xf32>
    %8 = arith.addf %5, %7 : vector<256x8xf32>
    %cst_7 = arith.constant 0.000000e+00 : f32
    %9 = vector.broadcast %cst_7 : f32 to vector<256x8xf32>
    %10 = arith.maximumf %8, %9 : vector<256x8xf32>
    %11 = arith.truncf %10 : vector<256x8xf32> to vector<256x8xbf16>
    %c0_8 = arith.constant 0 : index
    %c0_9 = arith.constant 0 : index
    %12 = vector.load %arg5[%c0_8, %c0_9] : memref<256x8xbf16, #tpu.memory_space<vmem>>, vector<256x8xbf16>
    tpu.vector_store %arg5[%c0_8, %c0_9], %11 {strides = array<i32>} : memref<256x8xbf16, #tpu.memory_space<vmem>>, vector<256x8xbf16>,
    return
  }
  func.func @transform_0(%arg0: i32) -> (i32, i32) {
    %c0_i32 = arith.constant 0 : i32
    %c0_i32_0 = arith.constant 0 : i32
    return %arg0, %c0_i32 : i32, i32
  }
  func.func @transform_1(%arg0: i32) -> (i32, i32) {
    %c0_i32 = arith.constant 0 : i32
    %c0_i32_0 = arith.constant 0 : i32
    %c0_i32_1 = arith.constant 0 : i32
    return %c0_i32, %c0_i32_0 : i32, i32
  }
  func.func @transform_2(%arg0: i32) -> (i32, i32) {
    %c0_i32 = arith.constant 0 : i32
    %c0_i32_0 = arith.constant 0 : i32
    %c0_i32_1 = arith.constant 0 : i32
    return %c0_i32, %c0_i32_0 : i32, i32
  }
  func.func @transform_3(%arg0: i32) -> (i32, i32) {
    %c0_i32 = arith.constant 0 : i32
    %c0_i32_0 = arith.constant 0 : i32
    %c0_i32_1 = arith.constant 0 : i32
    return %c0_i32, %c0_i32_0 : i32, i32
  }
  func.func @transform_4(%arg0: i32) -> (i32, i32) {
    %c0_i32 = arith.constant 0 : i32
    %c0_i32_0 = arith.constant 0 : i32
    return %arg0, %c0_i32 : i32, i32
  }
}

</mosaic_0001>

<llo_original>
// kernel: tpu_custom_call.1
$region0: #{tpu_custom_call.1}
  #allocation0 [shape = 'u32[]', space=smem, size = 0x4, offset = 0x4, fixed_abs, tag = 'smem constant byte address 0x4 - core index']
  #allocation1 [shape = 'u32[144,128]{1,0:T(1,128)}', space=vmem, size = 0x12000, scoped, tag = 'internal scratch']
  %s0 = inlined_call_operand.vmem [shape: bf16[512,9], index: 0, kind: input, shape index: {}]
  %s1 = inlined_call_operand.vmem [shape: bf16[9,8], index: 1, kind: input, shape index: {}]
  %s2 = inlined_call_operand.vmem [shape: f32[1,8], index: 2, kind: input, shape index: {}]
  %s3 = inlined_call_operand.vmem [shape: f32[1,8], index: 3, kind: input, shape index: {}]
  %s4 = inlined_call_operand.vmem [shape: bf16[512,8], index: 4, kind: output, shape index: {}]
  %s5 = sld [smem:[#allocation0]]
  $region49: #{tpu_custom_call.1} parent=0
    _
  %s7 = ssub.s32 1, %s5
  %s8 = scalar_select 0, %s7, %s5
  loop: start=0, step=1, limit=4
  $region2: #{tpu_custom_call.1} parent=0 // loop_pre_header
    _
  $region3: #{tpu_custom_call.1} parent=0 // loop_header
    %s10 = sphi 0, %s14
    %p11 = scmp.ge.s32.totalorder %s10, 4
    %s20 = sphi 0, %s22
    %s23 = sphi 0, %s20
    %s24 = sphi 0, %s23
    %s40 = sphi 0, %s24
    %s44 = sphi 0, %s44
    %s46 = sphi 0, %s44
    %s47 = sphi 0, %s46
    %s61 = sphi 0, %s47
    %s65 = sphi 0, %s65
    %s67 = sphi 0, %s65
    %s68 = sphi 0, %s67
    %s82 = sphi 0, %s68
    %s86 = sphi 0, %s86
    %s88 = sphi 0, %s86
    %s89 = sphi 0, %s88
    %s103 = sphi 0, %s89
    %s109 = sphi 0, %s111
    %s112 = sphi 0, %s109
    %s113 = sphi 0, %s112
    %s129 = sphi 0, %s113
  $region4: #{tpu_custom_call.1} parent=0 // loop_header_branch
    %13 = sbr.rel (%p11) target = $region8
  $region5: #{tpu_custom_call.1} parent=0 // loop_body
    %s15 = ssub.s32 %s10, 1
    %s16 = ssub.s32 %s10, 2
    %s17 = sadd.s32 %s10, 1
    %s18 = ssub.s32 %s10, %s17
    %p19 = scmp.eq.s32.totalorder %s18, 0
    %s21 = sadd.s32 %s20, 1
    %s22 = scalar_select %p19, %s20, %s21
    %p25 = pneg %p19
    %p26 = scmp.eq.s32.totalorder %s10, 1
    %p27 = por %p25, %p26
    %p28 = scmp.ne.s32.totalorder %s20, %s23
    %p29 = scmp.eq.s32.totalorder %s10, 0
    %p30 = por %p28, %p29
    %p31 = scmp.ne.s32.totalorder %s20, %s23
    %p32 = scmp.eq.s32.totalorder %s15, 1
    %p33 = por %p31, %p32
    %p34 = scmp.ne.s32.totalorder %s23, %s24
    %p35 = scmp.eq.s32.totalorder %s15, 0
    %p36 = por %p34, %p35
    %p37 = scmp.ne.s32.totalorder %s23, %s24
    %p38 = scmp.eq.s32.totalorder %s16, 1
    %p39 = por %p37, %p38
    %p41 = scmp.ne.s32.totalorder %s24, %s40
    %p42 = scmp.eq.s32.totalorder %s16, 0
    %p43 = por %p41, %p42
    %s45 = sadd.s32 %s44, 1
    %p48 = scmp.eq.s32.totalorder %s10, 1
    %p49 = scmp.ne.s32.totalorder %s44, %s46
    %p50 = scmp.eq.s32.totalorder %s10, 0
    %p51 = por %p49, %p50
    %p52 = scmp.ne.s32.totalorder %s44, %s46
    %p53 = scmp.eq.s32.totalorder %s15, 1
    %p54 = por %p52, %p53
    %p55 = scmp.ne.s32.totalorder %s46, %s47
    %p56 = scmp.eq.s32.totalorder %s15, 0
    %p57 = por %p55, %p56
    %p58 = scmp.ne.s32.totalorder %s46, %s47
    %p59 = scmp.eq.s32.totalorder %s16, 1
    %p60 = por %p58, %p59
    %p62 = scmp.ne.s32.totalorder %s47, %s61
    %p63 = scmp.eq.s32.totalorder %s16, 0
    %p64 = por %p62, %p63
    %s66 = sadd.s32 %s65, 1
    %p69 = scmp.eq.s32.totalorder %s10, 1
    %p70 = scmp.ne.s32.totalorder %s65, %s67
    %p71 = scmp.eq.s32.totalorder %s10, 0
    %p72 = por %p70, %p71
    %p73 = scmp.ne.s32.totalorder %s65, %s67
    %p74 = scmp.eq.s32.totalorder %s15, 1
    %p75 = por %p73, %p74
    %p76 = scmp.ne.s32.totalorder %s67, %s68
    %p77 = scmp.eq.s32.totalorder %s15, 0
    %p78 = por %p76, %p77
    %p79 = scmp.ne.s32.totalorder %s67, %s68
    %p80 = scmp.eq.s32.totalorder %s16, 1
    %p81 = por %p79, %p80
    %p83 = scmp.ne.s32.totalorder %s68, %s82
    %p84 = scmp.eq.s32.totalorder %s16, 0
    %p85 = por %p83, %p84
    %s87 = sadd.s32 %s86, 1
    %p90 = scmp.eq.s32.totalorder %s10, 1
    %p91 = scmp.ne.s32.totalorder %s86, %s88
    %p92 = scmp.eq.s32.totalorder %s10, 0
    %p93 = por %p91, %p92
    %p94 = scmp.ne.s32.totalorder %s86, %s88
    %p95 = scmp.eq.s32.totalorder %s15, 1
    %p96 = por %p94, %p95
    %p97 = scmp.ne.s32.totalorder %s88, %s89
    %p98 = scmp.eq.s32.totalorder %s15, 0
    %p99 = por %p97, %p98
    %p100 = scmp.ne.s32.totalorder %s88, %s89
    %p101 = scmp.eq.s32.totalorder %s16, 1
    %p102 = por %p100, %p101
    %p104 = scmp.ne.s32.totalorder %s89, %s103
    %p105 = scmp.eq.s32.totalorder %s16, 0
    %p106 = por %p104, %p105
    %s107 = ssub.s32 %s10, %s17
    %p108 = scmp.eq.s32.totalorder %s107, 0
    %s110 = sadd.s32 %s109, 1
    %s111 = scalar_select %p108, %s109, %s110
    %p114 = pneg %p108
    %p115 = scmp.eq.s32.totalorder %s10, 1
    %p116 = por %p114, %p115
    %p117 = scmp.ne.s32.totalorder %s109, %s112
    %p118 = scmp.eq.s32.totalorder %s10, 0
    %p119 = por %p117, %p118
    %p120 = scmp.ne.s32.totalorder %s109, %s112
    %p121 = scmp.eq.s32.totalorder %s15, 1
    %p122 = por %p120, %p121
    %p123 = scmp.ne.s32.totalorder %s112, %s113
    %p124 = scmp.eq.s32.totalorder %s15, 0
    %p125 = por %p123, %p124
    %p126 = scmp.ne.s32.totalorder %s112, %s113
    %p127 = scmp.eq.s32.totalorder %s16, 1
    %p128 = por %p126, %p127
    %p130 = scmp.ne.s32.totalorder %s113, %s129
    %p131 = scmp.eq.s32.totalorder %s16, 0
    %p132 = por %p130, %p131
    %p133 = scmp.le.s32.totalorder 1, %s10
    %p134 = scmp.lt.s32.totalorder %s10, 3
    %p135 = pnand %p133, %p134
    %p136 = pneg %p135
    // Predicated region
    $region9: #{tpu_custom_call.1} parent=5 // pred_check
      _
    $region10: #{tpu_custom_call.1} parent=5 // pred_check_branch
      %138 = sbr.rel (%p135) target = $region12
    $region11: #{tpu_custom_call.1} parent=5 // pred_region
      %s139 = ssub.s32 %s10, 1
      // Predicated region
      $region13: #{tpu_custom_call.1} parent=11 // pred_check
        %p140 = pneg %p57
      $region14: #{tpu_custom_call.1} parent=11 // pred_check_branch
        %142 = sbr.rel (%p140) target = $region16
      $region15: #{tpu_custom_call.1} parent=11 // pred_region
        _
      $region16: #{tpu_custom_call.1} parent=11 // pred_fallthru
        _
      // Predicated region
      $region17: #{tpu_custom_call.1} parent=11 // pred_check
        %p143 = pneg %p78
      $region18: #{tpu_custom_call.1} parent=11 // pred_check_branch
        %145 = sbr.rel (%p143) target = $region20
      $region19: #{tpu_custom_call.1} parent=11 // pred_region
        _
      $region20: #{tpu_custom_call.1} parent=11 // pred_fallthru
        _
      // Predicated region
      $region21: #{tpu_custom_call.1} parent=11 // pred_check
        %p146 = pneg %p99
      $region22: #{tpu_custom_call.1} parent=11 // pred_check_branch
        %148 = sbr.rel (%p146) target = $region24
      $region23: #{tpu_custom_call.1} parent=11 // pred_region
        _
      $region24: #{tpu_custom_call.1} parent=11 // pred_fallthru
        _
    $region12: #{tpu_custom_call.1} parent=5 // pred_fallthru
      _
    %p149 = scmp.lt.s32.totalorder %s10, 2
    // Predicated region
    $region25: #{tpu_custom_call.1} parent=5 // pred_check
      %p150 = pneg %p149
    $region26: #{tpu_custom_call.1} parent=5 // pred_check_branch
      %152 = sbr.rel (%p150) target = $region28
    $region27: #{tpu_custom_call.1} parent=5 // pred_region
      // Predicated region
      $region29: #{tpu_custom_call.1} parent=27 // pred_check
        %p153 = pneg %p30
      $region30: #{tpu_custom_call.1} parent=27 // pred_check_branch
        %155 = sbr.rel (%p153) target = $region32
      $region31: #{tpu_custom_call.1} parent=27 // pred_region
        %s156 = smul.u32 32, %s10
        %p157 = scmp.lt.s32.totalorder %s156, 63
        %s158 = scalar_select %p157, %s156, 63
        %s159 = smul.addr %s158, 4
        %s160 = scalar_lea.vmem %s0, %s159
        %s161 = smul.u32 32, %s10
      $region32: #{tpu_custom_call.1} parent=27 // pred_fallthru
        _
    $region28: #{tpu_custom_call.1} parent=5 // pred_fallthru
      _
    %p162 = scmp.le.s32.totalorder 1, %s10
    %p163 = scmp.lt.s32.totalorder %s10, 3
    %p164 = pnand %p162, %p163
    %p165 = pneg %p164
    // Predicated region
    $region33: #{tpu_custom_call.1} parent=5 // pred_check
      _
    $region34: #{tpu_custom_call.1} parent=5 // pred_check_branch
      %167 = sbr.rel (%p164) target = $region36
    $region35: #{tpu_custom_call.1} parent=5 // pred_region
      %s168 = ssub.s32 %s10, 1
      %s169 = smul.u32 32, %s15
      %p170 = scmp.lt.s32.totalorder %s169, 63
      %s171 = scalar_select %p170, %s169, 63
      %s172 = smul.addr %s171, 4
      %s173 = scalar_lea.vmem %s0, %s172
      %p174 = pneg %p36
      %p175 = pneg %p33
      %p176 = pneg %p57
      %p177 = pneg %p54
      %p178 = pneg %p78
      %p179 = pneg %p75
      %p180 = pneg %p99
      %p181 = pneg %p96
      %p182 = pneg %p125
      %p183 = pneg %p122
      %s184 = smul.u32 32, %s15
      %p185 = scmp.lt.s32.totalorder %s184, 63
      %s186 = scalar_select %p185, %s184, 63
      %s187 = smul.addr %s186, 4
      %s188 = scalar_lea.vmem %s4, %s187
      %s189 = smul.u32 32, %s15
      %p190 = scmp.lt.s32.totalorder %s189, 63
      %s191 = scalar_select %p190, %s189, 63
      %s192 = smul.addr %s191, 4
      %s193 = scalar_lea.vmem %s0, %s192
      %s194 = smul.u32 32, %s15
      %s195 = smul.u32 32, %s15
      %p196 = scmp.lt.s32.totalorder %s195, 63
      %s197 = scalar_select %p196, %s195, 63
      %s198 = smul.addr %s197, 4
      %s199 = scalar_lea.vmem %s4, %s198
      %s200 = smul.u32 32, %s15
      %v202 = vld [vmem:[%s193] sm:$0xf]
      %v203 = vld [vmem:[%s193 + $0x4] sm:$0xf]
      %v204 = vld [vmem:[%s193 + $0x8] sm:$0xf]
      %v205 = vld [vmem:[%s193 + $0xc] sm:$0xf]
      %v206 = vld [vmem:[%s193 + $0x10] sm:$0xf]
      %v207 = vld [vmem:[%s193 + $0x14] sm:$0xf]
      %v208 = vld [vmem:[%s193 + $0x18] sm:$0xf]
      %v209 = vld [vmem:[%s193 + $0x1c] sm:$0xf]
      %v210 = vld [vmem:[%s193 + $0x20] sm:$0xf]
      %v211 = vld [vmem:[%s193 + $0x24] sm:$0xf]
      %v212 = vld [vmem:[%s193 + $0x28] sm:$0xf]
      %v213 = vld [vmem:[%s193 + $0x2c] sm:$0xf]
      %v214 = vld [vmem:[%s193 + $0x30] sm:$0xf]
      %v215 = vld [vmem:[%s193 + $0x34] sm:$0xf]
      %v216 = vld [vmem:[%s193 + $0x38] sm:$0xf]
      %v217 = vld [vmem:[%s193 + $0x3c] sm:$0xf]
      %v218 = vld [vmem:[%s193 + $0x40] sm:$0xf]
      %v219 = vld [vmem:[%s193 + $0x44] sm:$0xf]
      %v220 = vld [vmem:[%s193 + $0x48] sm:$0xf]
      %v221 = vld [vmem:[%s193 + $0x4c] sm:$0xf]
      %v222 = vld [vmem:[%s193 + $0x50] sm:$0xf]
      %v223 = vld [vmem:[%s193 + $0x54] sm:$0xf]
      %v224 = vld [vmem:[%s193 + $0x58] sm:$0xf]
      %v225 = vld [vmem:[%s193 + $0x5c] sm:$0xf]
      %v226 = vld [vmem:[%s193 + $0x60] sm:$0xf]
      %v227 = vld [vmem:[%s193 + $0x64] sm:$0xf]
      %v228 = vld [vmem:[%s193 + $0x68] sm:$0xf]
      %v229 = vld [vmem:[%s193 + $0x6c] sm:$0xf]
      %v230 = vld [vmem:[%s193 + $0x70] sm:$0xf]
      %v231 = vld [vmem:[%s193 + $0x74] sm:$0xf]
      %v232 = vld [vmem:[%s193 + $0x78] sm:$0xf]
      %v233 = vld [vmem:[%s193 + $0x7c] sm:$0xf]
      %v234 = vld [vmem:[%s1] sm:$0xf]
      %v235 = vld [vmem:[%s1 + $0x4] sm:$0x1]
      %v268 = vunpack.c.l.b16 %v202
      %v269 = vunpack.c.l.b16 %v203
      %v270 = vunpack.c.l.b16 %v204
      %v271 = vunpack.c.l.b16 %v205
      %v272 = vunpack.c.l.b16 %v206
      %v273 = vunpack.c.l.b16 %v207
      %v274 = vunpack.c.l.b16 %v208
      %v275 = vunpack.c.l.b16 %v209
      %v276 = vunpack.c.l.b16 %v210
      %v277 = vunpack.c.l.b16 %v211
      %v278 = vunpack.c.l.b16 %v212
      %v279 = vunpack.c.l.b16 %v213
      %v280 = vunpack.c.l.b16 %v214
      %v281 = vunpack.c.l.b16 %v215
      %v282 = vunpack.c.l.b16 %v216
      %v283 = vunpack.c.l.b16 %v217
      %v284 = vunpack.c.l.b16 %v218
      %v285 = vunpack.c.l.b16 %v219
      %v286 = vunpack.c.l.b16 %v220
      %v287 = vunpack.c.l.b16 %v221
      %v288 = vunpack.c.l.b16 %v222
      %v289 = vunpack.c.l.b16 %v223
      %v290 = vunpack.c.l.b16 %v224
      %v291 = vunpack.c.l.b16 %v225
      %v292 = vunpack.c.l.b16 %v226
      %v293 = vunpack.c.l.b16 %v227
      %v294 = vunpack.c.l.b16 %v228
      %v295 = vunpack.c.l.b16 %v229
      %v296 = vunpack.c.l.b16 %v230
      %v297 = vunpack.c.l.b16 %v231
      %v298 = vunpack.c.l.b16 %v232
      %v299 = vunpack.c.l.b16 %v233
      %v300 = vpack.c.b16 %v269, %v268
      %v301 = vpack.c.b16 %v271, %v270
      %v302 = vpack.c.b16 %v273, %v272
      %v303 = vpack.c.b16 %v275, %v274
      %v304 = vpack.c.b16 %v277, %v276
      %v305 = vpack.c.b16 %v279, %v278
      %v306 = vpack.c.b16 %v281, %v280
      %v307 = vpack.c.b16 %v283, %v282
      %v308 = vpack.c.b16 %v285, %v284
      %v309 = vpack.c.b16 %v287, %v286
      %v310 = vpack.c.b16 %v289, %v288
      %v311 = vpack.c.b16 %v291, %v290
      %v312 = vpack.c.b16 %v293, %v292
      %v313 = vpack.c.b16 %v295, %v294
      %v314 = vpack.c.b16 %v297, %v296
      %v315 = vpack.c.b16 %v299, %v298
      %v318 = vunpack.c.l.b16 %v234
      %v319 = vunpack.c.l.b16 %v235
      %v320 = vpack.c.b16 %v319, %v318
      %vm321 = vcmask 72704
      %v323 = vsel %vm321, %v300, 0
      %v326 = vsel %vm321, %v301, 0
      %v329 = vsel %vm321, %v302, 0
      %v332 = vsel %vm321, %v303, 0
      %v335 = vsel %vm321, %v304, 0
      %v338 = vsel %vm321, %v305, 0
      %v341 = vsel %vm321, %v306, 0
      %v344 = vsel %vm321, %v307, 0
      %v347 = vsel %vm321, %v308, 0
      %v350 = vsel %vm321, %v309, 0
      %v353 = vsel %vm321, %v310, 0
      %v356 = vsel %vm321, %v311, 0
      %v359 = vsel %vm321, %v312, 0
      %v362 = vsel %vm321, %v313, 0
      %v365 = vsel %vm321, %v314, 0
      %v368 = vsel %vm321, %v315, 0
      %vm370 = vcmask 1043456
      %vm371 = vcmask 1044480
      %v372 = vsel %vm370, 4294967295, 65535
      %v373 = vsel %vm371, %v372, 0
      %v375 = vand.u32 %v320, %v373
      %377 = vmatprep.subr.bf16.mxu0 0
      %378 = vmatpush1.bf16.msra.mxu0 %v375
      %379 = vmatprep.subr.bf16.mxu0 0
      %380 = vmatpush1.bf16.msra.mxu0 0
      %381 = vmatprep.subr.bf16.mxu0 0
      %382 = vmatpush1.bf16.msra.mxu0 0
      %383 = vmatprep.subr.bf16.mxu0 0
      %384 = vmatpush1.bf16.msra.mxu0 0
      %385 = vmatprep.subr.bf16.mxu0 0
      %386 = vmatpush1.bf16.msra.mxu0 0
      %387 = vmatprep.subr.bf16.mxu0 0
      %388 = vmatpush1.bf16.msra.mxu0 0
      %389 = vmatprep.subr.bf16.mxu0 0
      %390 = vmatpush1.bf16.msra.mxu0 0
      %391 = vmatprep.subr.bf16.mxu0 0
      %392 = vmatpush1.bf16.msra.mxu0 0
      %393 = vmatprep.subr.bf16.mxu0 0
      %394 = vmatpush1.bf16.msra.mxu0 0
      %395 = vmatprep.subr.bf16.mxu0 0
      %396 = vmatpush1.bf16.msra.mxu0 0
      %397 = vmatprep.subr.bf16.mxu0 0
      %398 = vmatpush1.bf16.msra.mxu0 0
      %399 = vmatprep.subr.bf16.mxu0 0
      %400 = vmatpush1.bf16.msra.mxu0 0
      %401 = vmatprep.subr.bf16.mxu0 0
      %402 = vmatpush1.bf16.msra.mxu0 0
      %403 = vmatprep.subr.bf16.mxu0 0
      %404 = vmatpush1.bf16.msra.mxu0 0
      %405 = vmatprep.subr.bf16.mxu0 0
      %406 = vmatpush1.bf16.msra.mxu0 0
      %407 = vmatprep.subr.bf16.mxu0 0
      %408 = vmatpush1.bf16.msra.mxu0 0
      %409 = vmatprep.mubr.bf16.mxu0 0
      %410 = vmatmul.mubr.bf16.gmra.mrb[0].mxu0 %v323
      %v411 = vpop.f32.mrb[0].mxu0
      %v412 = vadd.f32 0.0, %v411
      %v413 = vpop.f32.mrb[0].mxu0
      %v414 = vpop.f32.mrb[0].mxu0
      %v415 = vadd.f32 0.0, %v414
      %v416 = vpop.f32.mrb[0].mxu0
      %417 = vmatprep.mubr.bf16.mxu0 0
      %418 = vmatmul.mubr.bf16.gmra.mrb[0].mxu0 %v326
      %v419 = vpop.f32.mrb[0].mxu0
      %v420 = vadd.f32 0.0, %v419
      %v421 = vpop.f32.mrb[0].mxu0
      %v422 = vpop.f32.mrb[0].mxu0
      %v423 = vadd.f32 0.0, %v422
      %v424 = vpop.f32.mrb[0].mxu0
      %425 = vmatprep.mubr.bf16.mxu0 0
      %426 = vmatmul.mubr.bf16.gmra.mrb[0].mxu0 %v329
      %v427 = vpop.f32.mrb[0].mxu0
      %v428 = vadd.f32 0.0, %v427
      %v429 = vpop.f32.mrb[0].mxu0
      %v430 = vpop.f32.mrb[0].mxu0
      %v431 = vadd.f32 0.0, %v430
      %v432 = vpop.f32.mrb[0].mxu0
      %433 = vmatprep.mubr.bf16.mxu0 0
      %434 = vmatmul.mubr.bf16.gmra.mrb[0].mxu0 %v332
      %v435 = vpop.f32.mrb[0].mxu0
      %v436 = vadd.f32 0.0, %v435
      %v437 = vpop.f32.mrb[0].mxu0
      %v438 = vpop.f32.mrb[0].mxu0
      %v439 = vadd.f32 0.0, %v438
      %v440 = vpop.f32.mrb[0].mxu0
      %441 = vmatprep.mubr.bf16.mxu0 0
      %442 = vmatmul.mubr.bf16.gmra.mrb[0].mxu0 %v335
      %v443 = vpop.f32.mrb[0].mxu0
      %v444 = vadd.f32 0.0, %v443
      %v445 = vpop.f32.mrb[0].mxu0
      %v446 = vpop.f32.mrb[0].mxu0
      %v447 = vadd.f32 0.0, %v446
      %v448 = vpop.f32.mrb[0].mxu0
      %449 = vmatprep.mubr.bf16.mxu0 0
      %450 = vmatmul.mubr.bf16.gmra.mrb[0].mxu0 %v338
      %v451 = vpop.f32.mrb[0].mxu0
      %v452 = vadd.f32 0.0, %v451
      %v453 = vpop.f32.mrb[0].mxu0
      %v454 = vpop.f32.mrb[0].mxu0
      %v455 = vadd.f32 0.0, %v454
      %v456 = vpop.f32.mrb[0].mxu0
      %457 = vmatprep.mubr.bf16.mxu0 0
      %458 = vmatmul.mubr.bf16.gmra.mrb[0].mxu0 %v341
      %v459 = vpop.f32.mrb[0].mxu0
      %v460 = vadd.f32 0.0, %v459
      %v461 = vpop.f32.mrb[0].mxu0
      %v462 = vpop.f32.mrb[0].mxu0
      %v463 = vadd.f32 0.0, %v462
      %v464 = vpop.f32.mrb[0].mxu0
      %465 = vmatprep.mubr.bf16.mxu0 0
      %466 = vmatmul.mubr.bf16.gmra.mrb[0].mxu0 %v344
      %v467 = vpop.f32.mrb[0].mxu0
      %v468 = vadd.f32 0.0, %v467
      %v469 = vpop.f32.mrb[0].mxu0
      %v470 = vpop.f32.mrb[0].mxu0
      %v471 = vadd.f32 0.0, %v470
      %v472 = vpop.f32.mrb[0].mxu0
      %473 = vmatprep.mubr.bf16.mxu0 0
      %474 = vmatmul.mubr.bf16.gmra.mrb[0].mxu0 %v347
      %v475 = vpop.f32.mrb[0].mxu0
      %v476 = vadd.f32 0.0, %v475
      %v477 = vpop.f32.mrb[0].mxu0
      %v478 = vpop.f32.mrb[0].mxu0
      %v479 = vadd.f32 0.0, %v478
      %v480 = vpop.f32.mrb[0].mxu0
      %481 = vmatprep.mubr.bf16.mxu0 0
      %482 = vmatmul.mubr.bf16.gmra.mrb[0].mxu0 %v350
      %v483 = vpop.f32.mrb[0].mxu0
      %v484 = vadd.f32 0.0, %v483
      %v485 = vpop.f32.mrb[0].mxu0
      %v486 = vpop.f32.mrb[0].mxu0
      %v487 = vadd.f32 0.0, %v486
      %v488 = vpop.f32.mrb[0].mxu0
      %489 = vmatprep.mubr.bf16.mxu0 0
      %490 = vmatmul.mubr.bf16.gmra.mrb[0].mxu0 %v353
      %v491 = vpop.f32.mrb[0].mxu0
      %v492 = vadd.f32 0.0, %v491
      %v493 = vpop.f32.mrb[0].mxu0
      %v494 = vpop.f32.mrb[0].mxu0
      %v495 = vadd.f32 0.0, %v494
      %v496 = vpop.f32.mrb[0].mxu0
      %497 = vmatprep.mubr.bf16.mxu0 0
      %498 = vmatmul.mubr.bf16.gmra.mrb[0].mxu0 %v356
      %v499 = vpop.f32.mrb[0].mxu0
      %v500 = vadd.f32 0.0, %v499
      %v501 = vpop.f32.mrb[0].mxu0
      %v502 = vpop.f32.mrb[0].mxu0
      %v503 = vadd.f32 0.0, %v502
      %v504 = vpop.f32.mrb[0].mxu0
      %505 = vmatprep.mubr.bf16.mxu0 0
      %506 = vmatmul.mubr.bf16.gmra.mrb[0].mxu0 %v359
      %v507 = vpop.f32.mrb[0].mxu0
      %v508 = vadd.f32 0.0, %v507
      %v509 = vpop.f32.mrb[0].mxu0
      %v510 = vpop.f32.mrb[0].mxu0
      %v511 = vadd.f32 0.0, %v510
      %v512 = vpop.f32.mrb[0].mxu0
      %513 = vmatprep.mubr.bf16.mxu0 0
      %514 = vmatmul.mubr.bf16.gmra.mrb[0].mxu0 %v362
      %v515 = vpop.f32.mrb[0].mxu0
      %v516 = vadd.f32 0.0, %v515
      %v517 = vpop.f32.mrb[0].mxu0
      %v518 = vpop.f32.mrb[0].mxu0
      %v519 = vadd.f32 0.0, %v518
      %v520 = vpop.f32.mrb[0].mxu0
      %521 = vmatprep.mubr.bf16.mxu0 0
      %522 = vmatmul.mubr.bf16.gmra.mrb[0].mxu0 %v365
      %v523 = vpop.f32.mrb[0].mxu0
      %v524 = vadd.f32 0.0, %v523
      %v525 = vpop.f32.mrb[0].mxu0
      %v526 = vpop.f32.mrb[0].mxu0
      %v527 = vadd.f32 0.0, %v526
      %v528 = vpop.f32.mrb[0].mxu0
      %529 = vmatprep.mubr.bf16.mxu0 0
      %530 = vmatmul.mubr.bf16.gmra.mrb[0].mxu0 %v368
      %v531 = vpop.f32.mrb[0].mxu0
      %v532 = vadd.f32 0.0, %v531
      %v533 = vpop.f32.mrb[0].mxu0
      %v534 = vpop.f32.mrb[0].mxu0
      %v535 = vadd.f32 0.0, %v534
      %v536 = vpop.f32.mrb[0].mxu0
      %537 = vdwg.mxu0
      %v538 = vld [vmem:[%s2] sm:$0x1]
      %v540 = vlaneseq
      %v541 = vshrl.u32 %v540, 7
      %v542 = vsub.s32 0, %v541
      %v543 = vrot.slane %v538, %v542
      %v545 = vmul.f32 %v412, %v543
      %v546 = vmul.f32 %v415, %v543
      %v547 = vmul.f32 %v420, %v543
      %v548 = vmul.f32 %v423, %v543
      %v549 = vmul.f32 %v428, %v543
      %v550 = vmul.f32 %v431, %v543
      %v551 = vmul.f32 %v436, %v543
      %v552 = vmul.f32 %v439, %v543
      %v553 = vmul.f32 %v444, %v543
      %v554 = vmul.f32 %v447, %v543
      %v555 = vmul.f32 %v452, %v543
      %v556 = vmul.f32 %v455, %v543
      %v557 = vmul.f32 %v460, %v543
      %v558 = vmul.f32 %v463, %v543
      %v559 = vmul.f32 %v468, %v543
      %v560 = vmul.f32 %v471, %v543
      %v561 = vmul.f32 %v476, %v543
      %v562 = vmul.f32 %v479, %v543
      %v563 = vmul.f32 %v484, %v543
      %v564 = vmul.f32 %v487, %v543
      %v565 = vmul.f32 %v492, %v543
      %v566 = vmul.f32 %v495, %v543
      %v567 = vmul.f32 %v500, %v543
      %v568 = vmul.f32 %v503, %v543
      %v569 = vmul.f32 %v508, %v543
      %v570 = vmul.f32 %v511, %v543
      %v571 = vmul.f32 %v516, %v543
      %v572 = vmul.f32 %v519, %v543
      %v573 = vmul.f32 %v524, %v543
      %v574 = vmul.f32 %v527, %v543
      %v575 = vmul.f32 %v532, %v543
      %v576 = vmul.f32 %v535, %v543
      %v577 = vld [vmem:[%s3] sm:$0x1]
      %v579 = vlaneseq
      %v580 = vshrl.u32 %v579, 7
      %v581 = vsub.s32 0, %v580
      %v582 = vrot.slane %v577, %v581
      %v584 = vadd.f32 %v545, %v582
      %v585 = vadd.f32 %v546, %v582
      %v586 = vadd.f32 %v547, %v582
      %v587 = vadd.f32 %v548, %v582
      %v588 = vadd.f32 %v549, %v582
      %v589 = vadd.f32 %v550, %v582
      %v590 = vadd.f32 %v551, %v582
      %v591 = vadd.f32 %v552, %v582
      %v592 = vadd.f32 %v553, %v582
      %v593 = vadd.f32 %v554, %v582
      %v594 = vadd.f32 %v555, %v582
      %v595 = vadd.f32 %v556, %v582
      %v596 = vadd.f32 %v557, %v582
      %v597 = vadd.f32 %v558, %v582
      %v598 = vadd.f32 %v559, %v582
      %v599 = vadd.f32 %v560, %v582
      %v600 = vadd.f32 %v561, %v582
      %v601 = vadd.f32 %v562, %v582
      %v602 = vadd.f32 %v563, %v582
      %v603 = vadd.f32 %v564, %v582
      %v604 = vadd.f32 %v565, %v582
      %v605 = vadd.f32 %v566, %v582
      %v606 = vadd.f32 %v567, %v582
      %v607 = vadd.f32 %v568, %v582
      %v608 = vadd.f32 %v569, %v582
      %v609 = vadd.f32 %v570, %v582
      %v610 = vadd.f32 %v571, %v582
      %v611 = vadd.f32 %v572, %v582
      %v612 = vadd.f32 %v573, %v582
      %v613 = vadd.f32 %v574, %v582
      %v614 = vadd.f32 %v575, %v582
      %v615 = vadd.f32 %v576, %v582
      %v616 = vmax.f32 %v584, 0.0
      %v617 = vmax.f32 %v585, 0.0
      %v618 = vmax.f32 %v586, 0.0
      %v619 = vmax.f32 %v587, 0.0
      %v620 = vmax.f32 %v588, 0.0
      %v621 = vmax.f32 %v589, 0.0
      %v622 = vmax.f32 %v590, 0.0
      %v623 = vmax.f32 %v591, 0.0
      %v624 = vmax.f32 %v592, 0.0
      %v625 = vmax.f32 %v593, 0.0
      %v626 = vmax.f32 %v594, 0.0
      %v627 = vmax.f32 %v595, 0.0
      %v628 = vmax.f32 %v596, 0.0
      %v629 = vmax.f32 %v597, 0.0
      %v630 = vmax.f32 %v598, 0.0
      %v631 = vmax.f32 %v599, 0.0
      %v632 = vmax.f32 %v600, 0.0
      %v633 = vmax.f32 %v601, 0.0
      %v634 = vmax.f32 %v602, 0.0
      %v635 = vmax.f32 %v603, 0.0
      %v636 = vmax.f32 %v604, 0.0
      %v637 = vmax.f32 %v605, 0.0
      %v638 = vmax.f32 %v606, 0.0
      %v639 = vmax.f32 %v607, 0.0
      %v640 = vmax.f32 %v608, 0.0
      %v641 = vmax.f32 %v609, 0.0
      %v642 = vmax.f32 %v610, 0.0
      %v643 = vmax.f32 %v611, 0.0
      %v644 = vmax.f32 %v612, 0.0
      %v645 = vmax.f32 %v613, 0.0
      %v646 = vmax.f32 %v614, 0.0
      %v647 = vmax.f32 %v615, 0.0
      %v648 = vpack.c.bf16 %v617, %v616
      %v649 = vpack.c.bf16 %v619, %v618
      %v650 = vpack.c.bf16 %v621, %v620
      %v651 = vpack.c.bf16 %v623, %v622
      %v652 = vpack.c.bf16 %v625, %v624
      %v653 = vpack.c.bf16 %v627, %v626
      %v654 = vpack.c.bf16 %v629, %v628
      %v655 = vpack.c.bf16 %v631, %v630
      %v656 = vpack.c.bf16 %v633, %v632
      %v657 = vpack.c.bf16 %v635, %v634
      %v658 = vpack.c.bf16 %v637, %v636
      %v659 = vpack.c.bf16 %v639, %v638
      %v660 = vpack.c.bf16 %v641, %v640
      %v661 = vpack.c.bf16 %v643, %v642
      %v662 = vpack.c.bf16 %v645, %v644
      %v663 = vpack.c.bf16 %v647, %v646
      %v680 = vunpack.c.l.b16 %v648
      %v681 = vunpack.c.h.b16 %v648
      %v682 = vunpack.c.l.b16 %v649
      %v683 = vunpack.c.h.b16 %v649
      %v684 = vunpack.c.l.b16 %v650
      %v685 = vunpack.c.h.b16 %v650
      %v686 = vunpack.c.l.b16 %v651
      %v687 = vunpack.c.h.b16 %v651
      %v688 = vunpack.c.l.b16 %v652
      %v689 = vunpack.c.h.b16 %v652
      %v690 = vunpack.c.l.b16 %v653
      %v691 = vunpack.c.h.b16 %v653
      %v692 = vunpack.c.l.b16 %v654
      %v693 = vunpack.c.h.b16 %v654
      %v694 = vunpack.c.l.b16 %v655
      %v695 = vunpack.c.h.b16 %v655
      %v696 = vunpack.c.l.b16 %v656
      %v697 = vunpack.c.h.b16 %v656
      %v698 = vunpack.c.l.b16 %v657
      %v699 = vunpack.c.h.b16 %v657
      %v700 = vunpack.c.l.b16 %v658
      %v701 = vunpack.c.h.b16 %v658
      %v702 = vunpack.c.l.b16 %v659
      %v703 = vunpack.c.h.b16 %v659
      %v704 = vunpack.c.l.b16 %v660
      %v705 = vunpack.c.h.b16 %v660
      %v706 = vunpack.c.l.b16 %v661
      %v707 = vunpack.c.h.b16 %v661
      %v708 = vunpack.c.l.b16 %v662
      %v709 = vunpack.c.h.b16 %v662
      %v710 = vunpack.c.l.b16 %v663
      %v711 = vunpack.c.h.b16 %v663
      %v712 = vpack.c.b16 %v680, %v680
      %v713 = vpack.c.b16 %v681, %v681
      %v714 = vpack.c.b16 %v682, %v682
      %v715 = vpack.c.b16 %v683, %v683
      %v716 = vpack.c.b16 %v684, %v684
      %v717 = vpack.c.b16 %v685, %v685
      %v718 = vpack.c.b16 %v686, %v686
      %v719 = vpack.c.b16 %v687, %v687
      %v720 = vpack.c.b16 %v688, %v688
      %v721 = vpack.c.b16 %v689, %v689
      %v722 = vpack.c.b16 %v690, %v690
      %v723 = vpack.c.b16 %v691, %v691
      %v724 = vpack.c.b16 %v692, %v692
      %v725 = vpack.c.b16 %v693, %v693
      %v726 = vpack.c.b16 %v694, %v694
      %v727 = vpack.c.b16 %v695, %v695
      %v728 = vpack.c.b16 %v696, %v696
      %v729 = vpack.c.b16 %v697, %v697
      %v730 = vpack.c.b16 %v698, %v698
      %v731 = vpack.c.b16 %v699, %v699
      %v732 = vpack.c.b16 %v700, %v700
      %v733 = vpack.c.b16 %v701, %v701
      %v734 = vpack.c.b16 %v702, %v702
      %v735 = vpack.c.b16 %v703, %v703
      %v736 = vpack.c.b16 %v704, %v704
      %v737 = vpack.c.b16 %v705, %v705
      %v738 = vpack.c.b16 %v706, %v706
      %v739 = vpack.c.b16 %v707, %v707
      %v740 = vpack.c.b16 %v708, %v708
      %v741 = vpack.c.b16 %v709, %v709
      %v742 = vpack.c.b16 %v710, %v710
      %v743 = vpack.c.b16 %v711, %v711
      %vm776 = vcmask 60416
      %777 = vst.msk [vmem:[%s199] sm:$0xf] %vm776, %v712
      %778 = vst.msk [vmem:[%s199 + $0x4] sm:$0xf] %vm776, %v713
      %779 = vst.msk [vmem:[%s199 + $0x8] sm:$0xf] %vm776, %v714
      %780 = vst.msk [vmem:[%s199 + $0xc] sm:$0xf] %vm776, %v715
      %781 = vst.msk [vmem:[%s199 + $0x10] sm:$0xf] %vm776, %v716
      %782 = vst.msk [vmem:[%s199 + $0x14] sm:$0xf] %vm776, %v717
      %783 = vst.msk [vmem:[%s199 + $0x18] sm:$0xf] %vm776, %v718
      %784 = vst.msk [vmem:[%s199 + $0x1c] sm:$0xf] %vm776, %v719
      %785 = vst.msk [vmem:[%s199 + $0x20] sm:$0xf] %vm776, %v720
      %786 = vst.msk [vmem:[%s199 + $0x24] sm:$0xf] %vm776, %v721
      %787 = vst.msk [vmem:[%s199 + $0x28] sm:$0xf] %vm776, %v722
      %788 = vst.msk [vmem:[%s199 + $0x2c] sm:$0xf] %vm776, %v723
      %789 = vst.msk [vmem:[%s199 + $0x30] sm:$0xf] %vm776, %v724
      %790 = vst.msk [vmem:[%s199 + $0x34] sm:$0xf] %vm776, %v725
      %791 = vst.msk [vmem:[%s199 + $0x38] sm:$0xf] %vm776, %v726
      %792 = vst.msk [vmem:[%s199 + $0x3c] sm:$0xf] %vm776, %v727
      %793 = vst.msk [vmem:[%s199 + $0x40] sm:$0xf] %vm776, %v728
      %794 = vst.msk [vmem:[%s199 + $0x44] sm:$0xf] %vm776, %v729
      %795 = vst.msk [vmem:[%s199 + $0x48] sm:$0xf] %vm776, %v730
      %796 = vst.msk [vmem:[%s199 + $0x4c] sm:$0xf] %vm776, %v731
      %797 = vst.msk [vmem:[%s199 + $0x50] sm:$0xf] %vm776, %v732
      %798 = vst.msk [vmem:[%s199 + $0x54] sm:$0xf] %vm776, %v733
      %799 = vst.msk [vmem:[%s199 + $0x58] sm:$0xf] %vm776, %v734
      %800 = vst.msk [vmem:[%s199 + $0x5c] sm:$0xf] %vm776, %v735
      %801 = vst.msk [vmem:[%s199 + $0x60] sm:$0xf] %vm776, %v736
      %802 = vst.msk [vmem:[%s199 + $0x64] sm:$0xf] %vm776, %v737
      %803 = vst.msk [vmem:[%s199 + $0x68] sm:$0xf] %vm776, %v738
      %804 = vst.msk [vmem:[%s199 + $0x6c] sm:$0xf] %vm776, %v739
      %805 = vst.msk [vmem:[%s199 + $0x70] sm:$0xf] %vm776, %v740
      %806 = vst.msk [vmem:[%s199 + $0x74] sm:$0xf] %vm776, %v741
      %807 = vst.msk [vmem:[%s199 + $0x78] sm:$0xf] %vm776, %v742
      %808 = vst.msk [vmem:[%s199 + $0x7c] sm:$0xf] %vm776, %v743
      %s809 = smul.u32 32, %s15
      %p810 = scmp.lt.s32.totalorder %s809, 63
      %s811 = scalar_select %p810, %s809, 63
      %s812 = smul.addr %s811, 4
      %s813 = scalar_lea.vmem %s4, %s812
      // Predicated region
      $region37: #{tpu_custom_call.1} parent=35 // pred_check
        %p814 = pneg %p122
      $region38: #{tpu_custom_call.1} parent=35 // pred_check_branch
        %816 = sbr.rel (%p814) target = $region40
      $region39: #{tpu_custom_call.1} parent=35 // pred_region
        %s817 = smul.u32 32, %s15
      $region40: #{tpu_custom_call.1} parent=35 // pred_fallthru
        _
    $region36: #{tpu_custom_call.1} parent=5 // pred_fallthru
      _
    %p818 = scmp.le.s32.totalorder 2, %s10
    // Predicated region
    $region41: #{tpu_custom_call.1} parent=5 // pred_check
      %p819 = pneg %p818
    $region42: #{tpu_custom_call.1} parent=5 // pred_check_branch
      %821 = sbr.rel (%p819) target = $region44
    $region43: #{tpu_custom_call.1} parent=5 // pred_region
      %s822 = ssub.s32 %s10, 2
      // Predicated region
      $region45: #{tpu_custom_call.1} parent=43 // pred_check
        %p823 = pneg %p128
      $region46: #{tpu_custom_call.1} parent=43 // pred_check_branch
        %825 = sbr.rel (%p823) target = $region48
      $region47: #{tpu_custom_call.1} parent=43 // pred_region
        %s826 = smul.u32 32, %s16
        %p827 = scmp.lt.s32.totalorder %s826, 63
        %s828 = scalar_select %p827, %s826, 63
        %s829 = smul.addr %s828, 4
        %s830 = scalar_lea.vmem %s4, %s829
      $region48: #{tpu_custom_call.1} parent=43 // pred_fallthru
        _
    $region44: #{tpu_custom_call.1} parent=5 // pred_fallthru
      _
  $region6: #{tpu_custom_call.1} parent=0 // loop_footer
    %s14 = sadd.s32 1, %s10
  $region7: #{tpu_custom_call.1} parent=0 // loop_footer_branch
    %9 = sbr.rel target = $region3
  $region8: #{tpu_custom_call.1} parent=0 // loop_exit
    _

</llo_original>
